<compile_context>
chip_gen: v6e
topology: v6e:2x2x1
jax: 0.10.0
libtpu: 0.0.40
codegen_flags: <defaults>
</compile_context>

<pallas_src>
import jax
import jax.numpy as jnp
import numpy as np
from jax import lax
from jax.experimental import pallas as pl
from jax.experimental.pallas import tpu as pltpu


_ACTIVATIONS = {
    "none": lambda v: v,
    "relu": lambda v: jnp.maximum(v, 0.0),
    "tanh": jnp.tanh,
    "gelu": jax.nn.gelu,
}


def _make_kernel(seq_len, n_layers, activation):
    L = seq_len
    act = _ACTIVATIONS[activation]

    def kernel(x_ref, w1_ref, w2_ref, sh_ref, o_ref):
        x = x_ref[...]                                  # (N, W) f32, W = TB * L
        N, W = x.shape

        # Per-sample position along the time axis (samples laid side by side).
        # Edge masks are computed ONCE and reused by every shift of every layer.
        lane = lax.broadcasted_iota(jnp.int32, (N, W), 1) % L
        not_first = lane != 0          # valid positions for x[l-1]
        not_last = lane != (L - 1)     # valid positions for x[l+1]

        def shift_prev(v):
            # out[:, l] = v[:, l-1] within each sample, 0 at l == 0 (pad edge).
            return jnp.where(not_first, pltpu.roll(v, shift=1, axis=1), 0.0)

        def shift_next(v):
            # out[:, l] = v[:, l+1] within each sample, 0 at l == L-1 (pad edge).
            return jnp.where(not_last, pltpu.roll(v, shift=W - 1, axis=1), 0.0)

        # Statically unrolled over the (small) number of stacked CovariateConv layers;
        # the slab never leaves VMEM between layers.
        for l in range(n_layers):
            w1 = w1_ref[l]             # (N, 3N)  block1 taps, BN scale folded in
            w2 = w2_ref[l]             # (N, 4N)  [block2 taps | conv1x1], BN scale folded
            sh = sh_ref[l]             # (N, 2)   per-channel shifts

            # block1: Conv2d(1,N,(N,3),pad=(0,1)) + BN(eval) + activation (+Dropout=id)
            s1 = jnp.concatenate([shift_prev(x), x, shift_next(x)], axis=0)        # (3N, W)
            y1 = jnp.dot(w1, s1, preferred_element_type=jnp.float32)
            y1 = act(y1 + sh[:, 0:1])

            # rearrange 'b n 1 l -> b 1 n l' is a relabeling of the same (N, L) slab.
            # block2 (BN scale folded) and conv1x1 fused into a single matmul:
            #   [w2_prev | w2_ctr | w2_next | w1x1] @ [y1_prev; y1; y1_next; x]
            s2 = jnp.concatenate([shift_prev(y1), y1, shift_next(y1), x], axis=0)  # (4N, W)
            x = jnp.dot(w2, s2, preferred_element_type=jnp.float32) + sh[:, 1:2]

        o_ref[...] = x.astype(o_ref.dtype)

    return kernel


def _choose_block_batch(B, L, N, budget_bytes=16 << 20):
    """Largest per-step batch TB (dividing B) whose lane width is 128-aligned and
    whose VMEM footprint (double-buffered in/out + in-kernel temporaries) fits the
    budget.  Prefer >=2 grid steps so the 'parallel' batch axis can shard across
    TensorCores on megacore parts (v7x)."""
    # per lane-column bytes: 2x double-buffered in/out (4*N*4B) + temporaries
    # x, y1, s1(3N), s2(4N), out (~10*N*4B).
    per_w_bytes = (4 + 10) * N * 4
    ok = []
    for tb in range(1, B + 1):
        if B % tb:
            continue
        w = tb * L
        lane_ok = (w % 128 == 0) or (tb == B)          # full-extent block is always legal
        if lane_ok and per_w_bytes * w <= budget_bytes:
            ok.append(tb)
    if not ok:
        return B
    multi = [tb for tb in ok if B // tb >= 2]
    return max(multi) if multi else max(ok)


def covariate_conv_forward(x, layers_params, eps=1e-5, activation="relu"):
    """x: (B, 1, n_vars, L) float32 -> (B, 1, n_vars, L) float32 (eval-mode forward).

    layers_params: a single param dict or a list of per-layer dicts (the stacked
    `covar_blocks` of Model). All layers are fused into one pallas_call."""
    if isinstance(layers_params, dict):
        layers_params = [layers_params]
    B, C, N, L = x.shape
    assert C == 1
    f32 = jnp.float32
    n_layers = len(layers_params)

    def fuse_taps(w):                       # (N,1,N,3) -> (N_out, 3N) as [prev|center|next]
        wk = w[:, 0].astype(f32)            # (N_out, N_height, 3)
        return jnp.concatenate([wk[:, :, 0], wk[:, :, 1], wk[:, :, 2]], axis=1)

    # Fold conv bias + BatchNorm (eval) into the conv weights / a per-channel shift:
    #   bn(conv_nobias + b) = conv_nobias * scale + ((b - mean) * scale + beta)
    w1_l, w2_l, sh_l = [], [], []
    for p in layers_params:
        scale1 = (p["gamma1"] / jnp.sqrt(p["var1"] + eps)).astype(f32)
        shift1 = ((p["b1"] - p["mean1"]) * scale1 + p["beta1"]).astype(f32)
        scale2 = (p["gamma2"] / jnp.sqrt(p["var2"] + eps)).astype(f32)
        shift2 = ((p["b2"] - p["mean2"]) * scale2 + p["beta2"]).astype(f32)

        w1 = fuse_taps(p["w1"]) * scale1[:, None]                      # (N, 3N)
        w2 = fuse_taps(p["w2"]) * scale2[:, None]                      # (N, 3N)
        w1x1 = p["w1x1"][:, 0, :, 0].astype(f32)                       # (N, N)
        w1_l.append(w1)
        w2_l.append(jnp.concatenate([w2, w1x1], axis=1))               # (N, 4N)
        sh_l.append(jnp.stack([shift1, shift2 + p["b1x1"].astype(f32)], axis=1))  # (N, 2)

    w1_all = jnp.stack(w1_l)                 # (n_layers, N, 3N)
    w2_all = jnp.stack(w2_l)                 # (n_layers, N, 4N)
    sh_all = jnp.stack(sh_l)                 # (n_layers, N, 2)

    # Layout plumbing: (B,1,N,L) -> (N, B*L) so the channel-mix matmuls get a wide,
    # lane-dense RHS and each grid step carries TB whole samples.
    x_flat = jnp.transpose(x[:, 0].astype(f32), (1, 0, 2)).reshape(N, B * L)

    TB = _choose_block_batch(B, L, N)
    W = TB * L
    grid = (B // TB,)

    out_flat = pl.pallas_call(
        _make_kernel(L, n_layers, activation),
        out_shape=jax.ShapeDtypeStruct((N, B * L), f32),
        grid_spec=pltpu.PrefetchScalarGridSpec(
            num_scalar_prefetch=0,
            grid=grid,
            in_specs=[
                pl.BlockSpec((N, W), lambda i: (0, i)),                    # x slab: TB samples
                pl.BlockSpec((n_layers, N, 3 * N), lambda i: (0, 0, 0)),   # fused block1 weights
                pl.BlockSpec((n_layers, N, 4 * N), lambda i: (0, 0, 0)),   # fused block2+1x1 weights
                pl.BlockSpec((n_layers, N, 2), lambda i: (0, 0, 0)),       # packed per-channel shifts
            ],
            out_specs=pl.BlockSpec((N, W), lambda i: (0, i)),
        ),
        compiler_params=pltpu.CompilerParams(dimension_semantics=("parallel",)),
    )(x_flat, w1_all, w2_all, sh_all)

    out = jnp.transpose(out_flat.reshape(N, B, L), (1, 0, 2))
    return out.reshape(B, 1, N, L)


def ref_forward(x, layers_params, eps=1e-5, activation="relu"):
    """Pure-JAX reference replicating the stacked PyTorch CovariateConv forward (eval)."""
    if isinstance(layers_params, dict):
        layers_params = [layers_params]
    act = _ACTIVATIONS[activation]
    B, _, N, L = x.shape

    def conv_nk3(xin, w, b):
        # xin: (B, 1, N, L); w: (N, 1, N, 3); PyTorch Conv2d semantics, pad=(0,1)
        xp = jnp.pad(xin[:, 0], ((0, 0), (0, 0), (1, 1)))                 # (B, N, L+2)
        xs = jnp.stack([xp[:, :, k:k + L] for k in range(3)], axis=-1)    # (B, N, L, 3)
        return jnp.einsum("bhlk,ohk->bol", xs, w[:, 0]) + b[None, :, None]

    def bn(y, g, be, m, v):
        return (y - m[None, :, None]) / jnp.sqrt(v[None, :, None] + eps) \
               * g[None, :, None] + be[None, :, None]

    for p in layers_params:
        y1 = act(bn(conv_nk3(x, p["w1"], p["b1"]),
                    p["gamma1"], p["beta1"], p["mean1"], p["var1"]))
        y2 = bn(conv_nk3(y1[:, None], p["w2"], p["b2"]),
                p["gamma2"], p["beta2"], p["mean2"], p["var2"])
        y3 = jnp.einsum("bhl,oh->bol", x[:, 0], p["w1x1"][:, 0, :, 0]) \
             + p["b1x1"][None, :, None]
        x = (y2 + y3)[:, None]
    return x


if __name__ == "__main__":
    B, N, L = 8, 8, 128          # batch, n_vars, sequence (feedback) length
    n_layers = 2                 # covar_layers: stacked CovariateConv blocks
    key = jax.random.PRNGKey(0)

    def make_layer(k):
        ks = jax.random.split(k, 14)
        return dict(
            w1=0.1 * jax.random.normal(ks[0], (N, 1, N, 3), jnp.float32),
            b1=0.1 * jax.random.normal(ks[1], (N,), jnp.float32),
            gamma1=1.0 + 0.1 * jax.random.normal(ks[2], (N,), jnp.float32),
            beta1=0.1 * jax.random.normal(ks[3], (N,), jnp.float32),
            mean1=0.1 * jax.random.normal(ks[4], (N,), jnp.float32),
            var1=jnp.abs(jax.random.normal(ks[5], (N,), jnp.float32)) + 0.5,
            w2=0.1 * jax.random.normal(ks[6], (N, 1, N, 3), jnp.float32),
            b2=0.1 * jax.random.normal(ks[7], (N,), jnp.float32),
            gamma2=1.0 + 0.1 * jax.random.normal(ks[8], (N,), jnp.float32),
            beta2=0.1 * jax.random.normal(ks[9], (N,), jnp.float32),
            mean2=0.1 * jax.random.normal(ks[10], (N,), jnp.float32),
            var2=jnp.abs(jax.random.normal(ks[11], (N,), jnp.float32)) + 0.5,
            w1x1=0.1 * jax.random.normal(ks[12], (N, 1, N, 1), jnp.float32),
            b1x1=0.1 * jax.random.normal(ks[13], (N,), jnp.float32),
        )

    keys = jax.random.split(key, n_layers + 1)
    layers = [make_layer(keys[i]) for i in range(n_layers)]
    x = jax.random.normal(keys[-1], (B, 1, N, L), jnp.float32)

    out = covariate_conv_forward(x, layers, activation="relu")
    out = jax.block_until_ready(out)

    ref = ref_forward(x, layers, activation="relu")
    np.testing.assert_allclose(np.asarray(out), np.asarray(ref), rtol=2e-4, atol=2e-4)
    print("KERNEL_OK")
</pallas_src>

<mosaic_0001>
module attributes {stable_mosaic.version = 11 : i64} {
  func.func @kernel(%arg0: i32, %arg1: memref<8x512xf32, #tpu.memory_space<vmem>>, %arg2: memref<2x8x24xf32, #tpu.memory_space<vmem>>, %arg3: memref<2x8x32xf32, #tpu.memory_space<vmem>>, %arg4: memref<2x8x2xf32, #tpu.memory_space<vmem>>, %arg5: memref<8x512xf32, #tpu.memory_space<vmem>>) attributes {dimension_semantics = [#tpu.dimension_semantics<parallel>], iteration_bounds = array<i64: 2>, scalar_prefetch = 0 : i64, scratch_operands = 0 : i64, tpu.core_type = #tpu.core_type<tc>, window_params = [{transform_indices = @transform_0, window_bounds = array<i64: 8, 512>}, {pipeline_mode = #tpu.pipeline_mode<synchronous>, transform_indices = @transform_1, window_bounds = array<i64: 2, 8, 24>}, {pipeline_mode = #tpu.pipeline_mode<synchronous>, transform_indices = @transform_2, window_bounds = array<i64: 2, 8, 32>}, {pipeline_mode = #tpu.pipeline_mode<synchronous>, transform_indices = @transform_3, window_bounds = array<i64: 2, 8, 2>}, {transform_indices = @transform_4, window_bounds = array<i64: 8, 512>}]} {
    %c0 = arith.constant 0 : index
    %c0_0 = arith.constant 0 : index
    %0 = vector.load %arg1[%c0, %c0_0] : memref<8x512xf32, #tpu.memory_space<vmem>>, vector<8x512xf32>
    %1 = tpu.iota {dimensions = array<i32: 1>} : vector<8x512xi32>
    %c128_i32 = arith.constant 128 : i32
    %c0_i32 = arith.constant 0 : i32
    %2 = arith.cmpi eq, %c128_i32, %c0_i32 : i32
    %c1_i32 = arith.constant 1 : i32
    %3 = arith.select %2, %c1_i32, %c128_i32 : i32
    %4 = vector.broadcast %3 : i32 to vector<8x512xi32>
    %5 = arith.remsi %1, %4 : vector<8x512xi32>
    %c0_i32_1 = arith.constant 0 : i32
    %6 = vector.broadcast %c0_i32_1 : i32 to vector<8x512xi32>
    %7 = arith.cmpi ne, %5, %6 : vector<8x512xi32>
    %c0_i32_2 = arith.constant 0 : i32
    %8 = vector.broadcast %c0_i32_2 : i32 to vector<8x512xi32>
    %9 = arith.cmpi slt, %5, %8 : vector<8x512xi32>
    %c0_i32_3 = arith.constant 0 : i32
    %10 = arith.cmpi slt, %3, %c0_i32_3 : i32
    %11 = vector.broadcast %10 : i1 to vector<8x512xi1>
    %12 = vector.broadcast %11 : vector<8x512xi1> to vector<8x512xi1>
    %13 = arith.xori %9, %12 : vector<8x512xi1>
    %14 = arith.andi %13, %7 : vector<8x512xi1>
    %15 = vector.broadcast %3 : i32 to vector<8x512xi32>
    %16 = arith.addi %5, %15 : vector<8x512xi32>
    %17 = arith.select %14, %16, %5 : vector<8x512xi1>, vector<8x512xi32>
    %c0_i32_4 = arith.constant 0 : i32
    %18 = vector.broadcast %c0_i32_4 : i32 to vector<8x512xi32>
    %19 = arith.cmpi ne, %17, %18 : vector<8x512xi32>
    %c127_i32 = arith.constant 127 : i32
    %20 = vector.broadcast %c127_i32 : i32 to vector<8x512xi32>
    %21 = arith.cmpi ne, %17, %20 : vector<8x512xi32>
    %c0_5 = arith.constant 0 : index
    %c0_6 = arith.constant 0 : index
    %c0_7 = arith.constant 0 : index
    %22 = vector.load %arg2[%c0_5, %c0_6, %c0_7] : memref<2x8x24xf32, #tpu.memory_space<vmem>>, vector<1x8x24xf32>
    %23 = vector.shape_cast %22 : vector<1x8x24xf32> to vector<8x24xf32>
    %c0_8 = arith.constant 0 : index
    %c0_9 = arith.constant 0 : index
    %c0_10 = arith.constant 0 : index
    %24 = vector.load %arg3[%c0_8, %c0_9, %c0_10] : memref<2x8x32xf32, #tpu.memory_space<vmem>>, vector<1x8x32xf32>
    %25 = vector.shape_cast %24 : vector<1x8x32xf32> to vector<8x32xf32>
    %c0_11 = arith.constant 0 : index
    %c0_12 = arith.constant 0 : index
    %c0_13 = arith.constant 0 : index
    %26 = vector.load %arg4[%c0_11, %c0_12, %c0_13] : memref<2x8x2xf32, #tpu.memory_space<vmem>>, vector<1x8x2xf32>
    %27 = vector.shape_cast %26 : vector<1x8x2xf32> to vector<8x2xf32>
    %c1_i32_14 = arith.constant 1 : i32
    %28 = tpu.dynamic_rotate %0 by %c1_i32_14 dim 1 : vector<8x512xf32>, i32 -> vector<8x512xf32>
    %cst = arith.constant 0.000000e+00 : f32
    %29 = vector.broadcast %cst : f32 to vector<8x512xf32>
    %30 = arith.select %19, %28, %29 : vector<8x512xi1>, vector<8x512xf32>
    %c511_i32 = arith.constant 511 : i32
    %31 = tpu.dynamic_rotate %0 by %c511_i32 dim 1 : vector<8x512xf32>, i32 -> vector<8x512xf32>
    %cst_15 = arith.constant 0.000000e+00 : f32
    %32 = vector.broadcast %cst_15 : f32 to vector<8x512xf32>
    %33 = arith.select %21, %31, %32 : vector<8x512xi1>, vector<8x512xf32>
    %34 = tpu.concatenate %30, %0, %33 in 0 : vector<8x512xf32>, vector<8x512xf32>, vector<8x512xf32> -> vector<24x512xf32>
    %cst_16 = arith.constant dense<0.000000e+00> : vector<8x512xf32>
    %35 = tpu.matmul %23, %34, %cst_16 {dimension_numbers = #tpu.dot_dimension_numbers<[1], [0], [0], [1], [0, 0, 1, 1], [], []>} : vector<8x24xf32>, vector<24x512xf32>, vector<8x512xf32> -> vector<8x512xf32>
    %36 = vector.extract_strided_slice %27 {offsets = [0, 0], sizes = [8, 1], strides = [1, 1]} : vector<8x2xf32> to vector<8x1xf32>
    %37 = vector.broadcast %36 : vector<8x1xf32> to vector<8x512xf32>
    %38 = arith.addf %35, %37 : vector<8x512xf32>
    %cst_17 = arith.constant 0.000000e+00 : f32
    %39 = vector.broadcast %cst_17 : f32 to vector<8x512xf32>
    %40 = arith.maximumf %38, %39 : vector<8x512xf32>
    %c1_i32_18 = arith.constant 1 : i32
    %41 = tpu.dynamic_rotate %40 by %c1_i32_18 dim 1 : vector<8x512xf32>, i32 -> vector<8x512xf32>
    %cst_19 = arith.constant 0.000000e+00 : f32
    %42 = vector.broadcast %cst_19 : f32 to vector<8x512xf32>
    %43 = arith.select %19, %41, %42 : vector<8x512xi1>, vector<8x512xf32>
    %c511_i32_20 = arith.constant 511 : i32
    %44 = tpu.dynamic_rotate %40 by %c511_i32_20 dim 1 : vector<8x512xf32>, i32 -> vector<8x512xf32>
    %cst_21 = arith.constant 0.000000e+00 : f32
    %45 = vector.broadcast %cst_21 : f32 to vector<8x512xf32>
    %46 = arith.select %21, %44, %45 : vector<8x512xi1>, vector<8x512xf32>
    %47 = tpu.concatenate %43, %40, %46, %0 in 0 : vector<8x512xf32>, vector<8x512xf32>, vector<8x512xf32>, vector<8x512xf32> -> vector<32x512xf32>
    %cst_22 = arith.constant dense<0.000000e+00> : vector<8x512xf32>
    %48 = tpu.matmul %25, %47, %cst_22 {dimension_numbers = #tpu.dot_dimension_numbers<[1], [0], [0], [1], [0, 0, 1, 1], [], []>} : vector<8x32xf32>, vector<32x512xf32>, vector<8x512xf32> -> vector<8x512xf32>
    %49 = vector.extract_strided_slice %27 {offsets = [0, 1], sizes = [8, 1], strides = [1, 1]} : vector<8x2xf32> to vector<8x1xf32>
    %50 = vector.broadcast %49 : vector<8x1xf32> to vector<8x512xf32>
    %51 = arith.addf %48, %50 : vector<8x512xf32>
    %c1 = arith.constant 1 : index
    %c0_23 = arith.constant 0 : index
    %c0_24 = arith.constant 0 : index
    %52 = vector.load %arg2[%c1, %c0_23, %c0_24] : memref<2x8x24xf32, #tpu.memory_space<vmem>>, vector<1x8x24xf32>
    %53 = vector.shape_cast %52 : vector<1x8x24xf32> to vector<8x24xf32>
    %c1_25 = arith.constant 1 : index
    %c0_26 = arith.constant 0 : index
    %c0_27 = arith.constant 0 : index
    %54 = vector.load %arg3[%c1_25, %c0_26, %c0_27] : memref<2x8x32xf32, #tpu.memory_space<vmem>>, vector<1x8x32xf32>
    %55 = vector.shape_cast %54 : vector<1x8x32xf32> to vector<8x32xf32>
    %c1_28 = arith.constant 1 : index
    %c0_29 = arith.constant 0 : index
    %c0_30 = arith.constant 0 : index
    %56 = vector.load %arg4[%c1_28, %c0_29, %c0_30] : memref<2x8x2xf32, #tpu.memory_space<vmem>>, vector<1x8x2xf32>
    %57 = vector.shape_cast %56 : vector<1x8x2xf32> to vector<8x2xf32>
    %c1_i32_31 = arith.constant 1 : i32
    %58 = tpu.dynamic_rotate %51 by %c1_i32_31 dim 1 : vector<8x512xf32>, i32 -> vector<8x512xf32>
    %cst_32 = arith.constant 0.000000e+00 : f32
    %59 = vector.broadcast %cst_32 : f32 to vector<8x512xf32>
    %60 = arith.select %19, %58, %59 : vector<8x512xi1>, vector<8x512xf32>
    %c511_i32_33 = arith.constant 511 : i32
    %61 = tpu.dynamic_rotate %51 by %c511_i32_33 dim 1 : vector<8x512xf32>, i32 -> vector<8x512xf32>
    %cst_34 = arith.constant 0.000000e+00 : f32
    %62 = vector.broadcast %cst_34 : f32 to vector<8x512xf32>
    %63 = arith.select %21, %61, %62 : vector<8x512xi1>, vector<8x512xf32>
    %64 = tpu.concatenate %60, %51, %63 in 0 : vector<8x512xf32>, vector<8x512xf32>, vector<8x512xf32> -> vector<24x512xf32>
    %cst_35 = arith.constant dense<0.000000e+00> : vector<8x512xf32>
    %65 = tpu.matmul %53, %64, %cst_35 {dimension_numbers = #tpu.dot_dimension_numbers<[1], [0], [0], [1], [0, 0, 1, 1], [], []>} : vector<8x24xf32>, vector<24x512xf32>, vector<8x512xf32> -> vector<8x512xf32>
    %66 = vector.extract_strided_slice %57 {offsets = [0, 0], sizes = [8, 1], strides = [1, 1]} : vector<8x2xf32> to vector<8x1xf32>
    %67 = vector.broadcast %66 : vector<8x1xf32> to vector<8x512xf32>
    %68 = arith.addf %65, %67 : vector<8x512xf32>
    %cst_36 = arith.constant 0.000000e+00 : f32
    %69 = vector.broadcast %cst_36 : f32 to vector<8x512xf32>
    %70 = arith.maximumf %68, %69 : vector<8x512xf32>
    %c1_i32_37 = arith.constant 1 : i32
    %71 = tpu.dynamic_rotate %70 by %c1_i32_37 dim 1 : vector<8x512xf32>, i32 -> vector<8x512xf32>
    %cst_38 = arith.constant 0.000000e+00 : f32
    %72 = vector.broadcast %cst_38 : f32 to vector<8x512xf32>
    %73 = arith.select %19, %71, %72 : vector<8x512xi1>, vector<8x512xf32>
    %c511_i32_39 = arith.constant 511 : i32
    %74 = tpu.dynamic_rotate %70 by %c511_i32_39 dim 1 : vector<8x512xf32>, i32 -> vector<8x512xf32>
    %cst_40 = arith.constant 0.000000e+00 : f32
    %75 = vector.broadcast %cst_40 : f32 to vector<8x512xf32>
    %76 = arith.select %21, %74, %75 : vector<8x512xi1>, vector<8x512xf32>
    %77 = tpu.concatenate %73, %70, %76, %51 in 0 : vector<8x512xf32>, vector<8x512xf32>, vector<8x512xf32>, vector<8x512xf32> -> vector<32x512xf32>
    %cst_41 = arith.constant dense<0.000000e+00> : vector<8x512xf32>
    %78 = tpu.matmul %55, %77, %cst_41 {dimension_numbers = #tpu.dot_dimension_numbers<[1], [0], [0], [1], [0, 0, 1, 1], [], []>} : vector<8x32xf32>, vector<32x512xf32>, vector<8x512xf32> -> vector<8x512xf32>
    %79 = vector.extract_strided_slice %57 {offsets = [0, 1], sizes = [8, 1], strides = [1, 1]} : vector<8x2xf32> to vector<8x1xf32>
    %80 = vector.broadcast %79 : vector<8x1xf32> to vector<8x512xf32>
    %81 = arith.addf %78, %80 : vector<8x512xf32>
    %c0_42 = arith.constant 0 : index
    %c0_43 = arith.constant 0 : index
    %82 = vector.load %arg5[%c0_42, %c0_43] : memref<8x512xf32, #tpu.memory_space<vmem>>, vector<8x512xf32>
    tpu.vector_store %arg5[%c0_42, %c0_43], %81 {strides = array<i32>} : memref<8x512xf32, #tpu.memory_space<vmem>>, vector<8x512xf32>,
    return
  }
  func.func @transform_0(%arg0: i32) -> (i32, i32) {
    %c0_i32 = arith.constant 0 : i32
    %c0_i32_0 = arith.constant 0 : i32
    return %c0_i32, %arg0 : i32, i32
  }
  func.func @transform_1(%arg0: i32) -> (i32, i32, i32) {
    %c0_i32 = arith.constant 0 : i32
    %c0_i32_0 = arith.constant 0 : i32
    %c0_i32_1 = arith.constant 0 : i32
    %c0_i32_2 = arith.constant 0 : i32
    return %c0_i32, %c0_i32_0, %c0_i32_1 : i32, i32, i32
  }
  func.func @transform_2(%arg0: i32) -> (i32, i32, i32) {
    %c0_i32 = arith.constant 0 : i32
    %c0_i32_0 = arith.constant 0 : i32
    %c0_i32_1 = arith.constant 0 : i32
    %c0_i32_2 = arith.constant 0 : i32
    return %c0_i32, %c0_i32_0, %c0_i32_1 : i32, i32, i32
  }
  func.func @transform_3(%arg0: i32) -> (i32, i32, i32) {
    %c0_i32 = arith.constant 0 : i32
    %c0_i32_0 = arith.constant 0 : i32
    %c0_i32_1 = arith.constant 0 : i32
    %c0_i32_2 = arith.constant 0 : i32
    return %c0_i32, %c0_i32_0, %c0_i32_1 : i32, i32, i32
  }
  func.func @transform_4(%arg0: i32) -> (i32, i32) {
    %c0_i32 = arith.constant 0 : i32
    %c0_i32_0 = arith.constant 0 : i32
    return %c0_i32, %arg0 : i32, i32
  }
}

</mosaic_0001>

<llo_original>
// kernel: tpu_custom_call.1
$region0: #{tpu_custom_call.1}
  #allocation0 [shape = 'u32[]', space=smem, size = 0x4, offset = 0x4, fixed_abs, tag = 'smem constant byte address 0x4 - core index']
  #allocation1 [shape = 'u32[144,128]{1,0:T(1,128)}', space=vmem, size = 0x12000, scoped, tag = 'internal scratch']
  %s0 = inlined_call_operand.hbm [shape: f32[8,1024], index: 0, kind: input, shape index: {}]
  %s1 = inlined_call_operand.vmem [shape: f32[2,8,24], index: 1, kind: input, shape index: {}]
  %s2 = inlined_call_operand.hbm [shape: f32[2,8,32], index: 2, kind: input, shape index: {}]
  %s3 = inlined_call_operand.vmem [shape: f32[2,8,2], index: 3, kind: input, shape index: {}]
  %s4 = inlined_call_operand.hbm [shape: f32[8,1024], index: 4, kind: output, shape index: {}]
  %s5 = sld [smem:[#allocation0]]
  $region57: #{tpu_custom_call.1} parent=0
    _
  %s7 = ssub.s32 1, %s5
  %s8 = scalar_select 0, %s7, %s5
  $region1: #{tpu_custom_call.1} parent=0
    #allocation2 [shape = 'u8[32768]{0}', space=vmem, size = 0x8000, scoped, tag = 'input window, operand 0']
    #allocation3 [shape = 's32[2]{0}', space=sflag, size = 0x8, scoped, tag = 'scoped memory for tpu_custom_call.1']
    #allocation4 [shape = 's32[2]{0}', space=sflag, size = 0x8, scoped, tag = 'scoped memory for tpu_custom_call.1']
    #allocation5 [shape = 'u8[8192]{0}', space=vmem, size = 0x2000, scoped, tag = 'input window, operand 2, single buffered']
    #allocation6 [shape = 's32[1]{0}', space=sflag, size = 0x4, scoped, tag = 'scoped memory for tpu_custom_call.1']
    #allocation7 [shape = 'u8[32768]{0}', space=vmem, size = 0x8000, scoped, tag = 'output window, operand 0']
    %9 = vsyncpa [#allocation3], 0
    %s10 = scalar_lea.sflag [#allocation3], 1
    %11 = vsyncpa %s10, 0
    %12 = vsyncpa [#allocation6], 0
    %13 = vsyncpa [#allocation4], 0
    %s14 = scalar_lea.sflag [#allocation4], 1
    %15 = vsyncpa %s14, 0
    loop: start=0, step=1, limit=4
    $region2: #{tpu_custom_call.1} parent=1 // loop_pre_header
      _
    $region3: #{tpu_custom_call.1} parent=1 // loop_header
      %s17 = sphi 0, %s21
      %p18 = scmp.ge.s32.totalorder %s17, 4
      %s27 = sphi 0, %s29
      %s30 = sphi 0, %s27
      %s31 = sphi 0, %s30
      %s47 = sphi 0, %s31
      %s51 = sphi 0, %s51
      %s53 = sphi 0, %s51
      %s54 = sphi 0, %s53
      %s68 = sphi 0, %s54
      %s72 = sphi 0, %s72
      %s74 = sphi 0, %s72
      %s75 = sphi 0, %s74
      %s89 = sphi 0, %s75
      %s93 = sphi 0, %s93
      %s95 = sphi 0, %s93
      %s96 = sphi 0, %s95
      %s110 = sphi 0, %s96
      %s116 = sphi 0, %s118
      %s119 = sphi 0, %s116
      %s120 = sphi 0, %s119
      %s136 = sphi 0, %s120
    $region4: #{tpu_custom_call.1} parent=1 // loop_header_branch
      %20 = sbr.rel (%p18) target = $region8
    $region5: #{tpu_custom_call.1} parent=1 // loop_body
      %s22 = ssub.s32 %s17, 1
      %s23 = ssub.s32 %s17, 2
      %s24 = sadd.s32 %s17, 1
      %s25 = ssub.s32 %s17, %s24
      %p26 = scmp.eq.s32.totalorder %s25, 0
      %s28 = sadd.s32 %s27, 1
      %s29 = scalar_select %p26, %s27, %s28
      %p32 = pneg %p26
      %p33 = scmp.eq.s32.totalorder %s17, 1
      %p34 = por %p32, %p33
      %p35 = scmp.ne.s32.totalorder %s27, %s30
      %p36 = scmp.eq.s32.totalorder %s17, 0
      %p37 = por %p35, %p36
      %p38 = scmp.ne.s32.totalorder %s27, %s30
      %p39 = scmp.eq.s32.totalorder %s22, 1
      %p40 = por %p38, %p39
      %p41 = scmp.ne.s32.totalorder %s30, %s31
      %p42 = scmp.eq.s32.totalorder %s22, 0
      %p43 = por %p41, %p42
      %p44 = scmp.ne.s32.totalorder %s30, %s31
      %p45 = scmp.eq.s32.totalorder %s23, 1
      %p46 = por %p44, %p45
      %p48 = scmp.ne.s32.totalorder %s31, %s47
      %p49 = scmp.eq.s32.totalorder %s23, 0
      %p50 = por %p48, %p49
      %s52 = sadd.s32 %s51, 1
      %p55 = scmp.eq.s32.totalorder %s17, 1
      %p56 = scmp.ne.s32.totalorder %s51, %s53
      %p57 = scmp.eq.s32.totalorder %s17, 0
      %p58 = por %p56, %p57
      %p59 = scmp.ne.s32.totalorder %s51, %s53
      %p60 = scmp.eq.s32.totalorder %s22, 1
      %p61 = por %p59, %p60
      %p62 = scmp.ne.s32.totalorder %s53, %s54
      %p63 = scmp.eq.s32.totalorder %s22, 0
      %p64 = por %p62, %p63
      %p65 = scmp.ne.s32.totalorder %s53, %s54
      %p66 = scmp.eq.s32.totalorder %s23, 1
      %p67 = por %p65, %p66
      %p69 = scmp.ne.s32.totalorder %s54, %s68
      %p70 = scmp.eq.s32.totalorder %s23, 0
      %p71 = por %p69, %p70
      %s73 = sadd.s32 %s72, 1
      %p76 = scmp.eq.s32.totalorder %s17, 1
      %p77 = scmp.ne.s32.totalorder %s72, %s74
      %p78 = scmp.eq.s32.totalorder %s17, 0
      %p79 = por %p77, %p78
      %p80 = scmp.ne.s32.totalorder %s72, %s74
      %p81 = scmp.eq.s32.totalorder %s22, 1
      %p82 = por %p80, %p81
      %p83 = scmp.ne.s32.totalorder %s74, %s75
      %p84 = scmp.eq.s32.totalorder %s22, 0
      %p85 = por %p83, %p84
      %p86 = scmp.ne.s32.totalorder %s74, %s75
      %p87 = scmp.eq.s32.totalorder %s23, 1
      %p88 = por %p86, %p87
      %p90 = scmp.ne.s32.totalorder %s75, %s89
      %p91 = scmp.eq.s32.totalorder %s23, 0
      %p92 = por %p90, %p91
      %s94 = sadd.s32 %s93, 1
      %p97 = scmp.eq.s32.totalorder %s17, 1
      %p98 = scmp.ne.s32.totalorder %s93, %s95
      %p99 = scmp.eq.s32.totalorder %s17, 0
      %p100 = por %p98, %p99
      %p101 = scmp.ne.s32.totalorder %s93, %s95
      %p102 = scmp.eq.s32.totalorder %s22, 1
      %p103 = por %p101, %p102
      %p104 = scmp.ne.s32.totalorder %s95, %s96
      %p105 = scmp.eq.s32.totalorder %s22, 0
      %p106 = por %p104, %p105
      %p107 = scmp.ne.s32.totalorder %s95, %s96
      %p108 = scmp.eq.s32.totalorder %s23, 1
      %p109 = por %p107, %p108
      %p111 = scmp.ne.s32.totalorder %s96, %s110
      %p112 = scmp.eq.s32.totalorder %s23, 0
      %p113 = por %p111, %p112
      %s114 = ssub.s32 %s17, %s24
      %p115 = scmp.eq.s32.totalorder %s114, 0
      %s117 = sadd.s32 %s116, 1
      %s118 = scalar_select %p115, %s116, %s117
      %p121 = pneg %p115
      %p122 = scmp.eq.s32.totalorder %s17, 1
      %p123 = por %p121, %p122
      %p124 = scmp.ne.s32.totalorder %s116, %s119
      %p125 = scmp.eq.s32.totalorder %s17, 0
      %p126 = por %p124, %p125
      %p127 = scmp.ne.s32.totalorder %s116, %s119
      %p128 = scmp.eq.s32.totalorder %s22, 1
      %p129 = por %p127, %p128
      %p130 = scmp.ne.s32.totalorder %s119, %s120
      %p131 = scmp.eq.s32.totalorder %s22, 0
      %p132 = por %p130, %p131
      %p133 = scmp.ne.s32.totalorder %s119, %s120
      %p134 = scmp.eq.s32.totalorder %s23, 1
      %p135 = por %p133, %p134
      %p137 = scmp.ne.s32.totalorder %s120, %s136
      %p138 = scmp.eq.s32.totalorder %s23, 0
      %p139 = por %p137, %p138
      %p140 = scmp.le.s32.totalorder 1, %s17
      %p141 = scmp.lt.s32.totalorder %s17, 3
      %p142 = pnand %p140, %p141
      %p143 = pneg %p142
      // Predicated region
      $region9: #{tpu_custom_call.1} parent=5 // pred_check
        _
      $region10: #{tpu_custom_call.1} parent=5 // pred_check_branch
        %145 = sbr.rel (%p142) target = $region12
      $region11: #{tpu_custom_call.1} parent=5 // pred_region
        %s146 = ssub.s32 %s17, 1
        // Predicated region
        $region13: #{tpu_custom_call.1} parent=11 // pred_check
          %p147 = pneg %p64
        $region14: #{tpu_custom_call.1} parent=11 // pred_check_branch
          %149 = sbr.rel (%p147) target = $region16
        $region15: #{tpu_custom_call.1} parent=11 // pred_region
          _
        $region16: #{tpu_custom_call.1} parent=11 // pred_fallthru
          _
        // Predicated region
        $region17: #{tpu_custom_call.1} parent=11 // pred_check
          %p150 = pneg %p85
        $region18: #{tpu_custom_call.1} parent=11 // pred_check_branch
          %152 = sbr.rel (%p150) target = $region20
        $region19: #{tpu_custom_call.1} parent=11 // pred_region
          %s154 = ssub.s32 256, 256
          %155 = vsyncadd [#allocation6], %s154
          %s156 = sshll.u32 [#allocation5], 4
          %s157 = int_to_ptr.vmem [resolvable:$true] %s156
          %162 = dma.hbm_to_vmem [thread:$0]  %s2, 256, %s157, [#allocation6], 128, 128, 8
        $region20: #{tpu_custom_call.1} parent=11 // pred_fallthru
          _
        // Predicated region
        $region21: #{tpu_custom_call.1} parent=11 // pred_check
          %p163 = pneg %p106
        $region22: #{tpu_custom_call.1} parent=11 // pred_check_branch
          %165 = sbr.rel (%p163) target = $region24
        $region23: #{tpu_custom_call.1} parent=11 // pred_region
          _
        $region24: #{tpu_custom_call.1} parent=11 // pred_fallthru
          _
      $region12: #{tpu_custom_call.1} parent=5 // pred_fallthru
        _
      %p166 = scmp.lt.s32.totalorder %s17, 2
      // Predicated region
      $region25: #{tpu_custom_call.1} parent=5 // pred_check
        %p167 = pneg %p166
      $region26: #{tpu_custom_call.1} parent=5 // pred_check_branch
        %169 = sbr.rel (%p167) target = $region28
      $region27: #{tpu_custom_call.1} parent=5 // pred_region
        // Predicated region
        $region29: #{tpu_custom_call.1} parent=27 // pred_check
          %p170 = pneg %p37
        $region30: #{tpu_custom_call.1} parent=27 // pred_check_branch
          %172 = sbr.rel (%p170) target = $region32
        $region31: #{tpu_custom_call.1} parent=27 // pred_region
          %s173 = sand.u32 %s27, 1
          %s174 = scalar_lea.sflag [#allocation3], %s173
          %s175 = sand.u32 %s27, 1
          %s176 = smul.addr %s175, 32
          %s177 = scalar_lea.vmem [#allocation2], %s176
          %s178 = smul.u32 4, %s17
          %s180 = ssub.s32 512, 512
          %181 = vsyncadd %s174, %s180
          %s182 = smul.addr %s178, 128
          %s183 = scalar_lea.hbm %s0, %s182
          %s185 = sshll.u32 %s177, 4
          %s186 = int_to_ptr.vmem [resolvable:$true] %s185
          %188 = dma.hbm_to_vmem [thread:$0]  %s183, 512, %s186, %s174
        $region32: #{tpu_custom_call.1} parent=27 // pred_fallthru
          _
      $region28: #{tpu_custom_call.1} parent=5 // pred_fallthru
        _
      %p189 = scmp.le.s32.totalorder 1, %s17
      %p190 = scmp.lt.s32.totalorder %s17, 3
      %p191 = pnand %p189, %p190
      %p192 = pneg %p191
      // Predicated region
      $region33: #{tpu_custom_call.1} parent=5 // pred_check
        _
      $region34: #{tpu_custom_call.1} parent=5 // pred_check_branch
        %194 = sbr.rel (%p191) target = $region36
      $region35: #{tpu_custom_call.1} parent=5 // pred_region
        %s195 = ssub.s32 %s17, 1
        %s196 = sand.u32 %s30, 1
        %s197 = scalar_lea.sflag [#allocation3], %s196
        %s198 = sand.u32 %s30, 1
        %s199 = smul.addr %s198, 32
        %s200 = scalar_lea.vmem [#allocation2], %s199
        // Predicated region
        $region37: #{tpu_custom_call.1} parent=35 // pred_check
          %p201 = pneg %p43
        $region38: #{tpu_custom_call.1} parent=35 // pred_check_branch
          %203 = sbr.rel (%p201) target = $region40
        $region39: #{tpu_custom_call.1} parent=35 // pred_region
          %204 = dma.done %s197, 512
        $region40: #{tpu_custom_call.1} parent=35 // pred_fallthru
          _
        // Predicated region
        $region41: #{tpu_custom_call.1} parent=35 // pred_check
          %p205 = pneg %p85
        $region42: #{tpu_custom_call.1} parent=35 // pred_check_branch
          %207 = sbr.rel (%p205) target = $region44
        $region43: #{tpu_custom_call.1} parent=35 // pred_region
          %208 = dma.done [#allocation6], 256
        $region44: #{tpu_custom_call.1} parent=35 // pred_fallthru
          _
        %s209 = sand.u32 %s30, 1
        %s210 = scalar_lea.sflag [#allocation3], %s209
        %s211 = sand.u32 %s30, 1
        %s212 = smul.addr %s211, 32
        %s213 = scalar_lea.vmem [#allocation2], %s212
        %p214 = pneg %p43
        %p215 = pneg %p40
        %p216 = pneg %p64
        %p217 = pneg %p61
        %p218 = pneg %p85
        %p219 = pneg %p82
        %p220 = pneg %p106
        %p221 = pneg %p103
        %p222 = pneg %p132
        %p223 = pneg %p129
        %s224 = sand.u32 %s119, 1
        %s225 = scalar_lea.sflag [#allocation4], %s224
        %s226 = sand.u32 %s119, 1
        %s227 = smul.addr %s226, 32
        %s228 = scalar_lea.vmem [#allocation7], %s227
        %s229 = smul.u32 4, %s22
        %s230 = smul.u32 4, %s22
        %v231 = vld [vmem:[%s200] sm:$0xff]
        %v232 = vld [vmem:[%s200 + $0x8] sm:$0xff]
        %v233 = vld [vmem:[%s200 + $0x10] sm:$0xff]
        %v234 = vld [vmem:[%s200 + $0x18] sm:$0xff]
        %v235 = vlaneseq
        %v236 = vand.u32 %v235, 127
        %v237 = vadd.s32 %v236, 128
        %v238 = vadd.s32 %v236, 256
        %v239 = vadd.s32 %v236, 384
        %vm240 = vcmp.lt.s32.totalorder %v236, 0
        %v241 = vsub.s32 0, %v236
        %v242 = vsel %vm240, %v241, %v236
        %v243 = vshrl.u32 %v242, 7
        %v244 = vand.u32 %v242, 127
        %v245 = vsub.s32 0, %v244
        %v246 = vsel %vm240, %v245, %v244
        %vm247 = vcmp.lt.s32.totalorder %v237, 0
        %v248 = vsub.s32 0, %v237
        %v249 = vsel %vm247, %v248, %v237
        %v250 = vshrl.u32 %v249, 7
        %v251 = vand.u32 %v249, 127
        %v252 = vsub.s32 0, %v251
        %v253 = vsel %vm247, %v252, %v251
        %vm254 = vcmp.lt.s32.totalorder %v238, 0
        %v255 = vsub.s32 0, %v238
        %v256 = vsel %vm254, %v255, %v238
        %v257 = vshrl.u32 %v256, 7
        %v258 = vand.u32 %v256, 127
        %v259 = vsub.s32 0, %v258
        %v260 = vsel %vm254, %v259, %v258
        %vm261 = vcmp.lt.s32.totalorder %v239, 0
        %v262 = vsub.s32 0, %v239
        %v263 = vsel %vm261, %v262, %v239
        %v264 = vshrl.u32 %v263, 7
        %v265 = vand.u32 %v263, 127
        %v266 = vsub.s32 0, %v265
        %v267 = vsel %vm261, %v266, %v265
        %vm268 = vcmp.ne.s32.totalorder %v246, 0
        %vm269 = vcmp.ne.s32.totalorder %v253, 0
        %vm270 = vcmp.ne.s32.totalorder %v260, 0
        %vm271 = vcmp.ne.s32.totalorder %v267, 0
        %vm272 = vcmp.lt.s32.totalorder %v246, 0
        %vm273 = vcmp.lt.s32.totalorder %v253, 0
        %vm274 = vcmp.lt.s32.totalorder %v260, 0
        %vm275 = vcmp.lt.s32.totalorder %v267, 0
        %vm276 = vmand %vm272, %vm268
        %vm277 = vmand %vm273, %vm269
        %vm278 = vmand %vm274, %vm270
        %vm279 = vmand %vm275, %vm271
        %v280 = vadd.s32 %v246, 128
        %v281 = vadd.s32 %v253, 128
        %v282 = vadd.s32 %v260, 128
        %v283 = vadd.s32 %v267, 128
        %v284 = vsel %vm276, %v280, %v246
        %v285 = vsel %vm277, %v281, %v253
        %v286 = vsel %vm278, %v282, %v260
        %v287 = vsel %vm279, %v283, %v267
        %vm288 = vcmp.ne.s32.totalorder %v284, 0
        %vm289 = vcmp.ne.s32.totalorder %v285, 0
        %vm290 = vcmp.ne.s32.totalorder %v286, 0
        %vm291 = vcmp.ne.s32.totalorder %v287, 0
        %vm292 = vcmp.ne.s32.totalorder %v284, 127
        %vm293 = vcmp.ne.s32.totalorder %v285, 127
        %vm294 = vcmp.ne.s32.totalorder %v286, 127
        %vm295 = vcmp.ne.s32.totalorder %v287, 127
        %v296 = vld [vmem:[%s1] sm:$0xff]
        %v297 = vld [vmem:[#allocation5] sm:$0xff]
        %v298 = vld [vmem:[%s3] sm:$0xff]
        %299 = vrot.lane.b32.xlu0 %v231, 1
        %v300 = vpop.permute.xlu0 %299
        %301 = vrot.lane.b32.xlu0 %v232, 1
        %v302 = vpop.permute.xlu0 %301
        %303 = vrot.lane.b32.xlu0 %v233, 1
        %v304 = vpop.permute.xlu0 %303
        %305 = vrot.lane.b32.xlu0 %v234, 1
        %v306 = vpop.permute.xlu0 %305
        %vm307 = vcmp.lt.s32.totalorder %v236, 1
        %v308 = vsel %vm307, %v304, %v306
        %v309 = vsel %vm307, %v302, %v304
        %v310 = vsel %vm307, %v300, %v302
        %v311 = vsel %vm307, %v306, %v300
        %v312 = vsel %vm288, %v311, 0.0
        %v313 = vsel %vm289, %v310, 0.0
        %v314 = vsel %vm290, %v309, 0.0
        %v315 = vsel %vm291, %v308, 0.0
        %316 = vrot.lane.b32.xlu0 %v231, 127
        %v317 = vpop.permute.xlu0 %316
        %318 = vrot.lane.b32.xlu0 %v232, 127
        %v319 = vpop.permute.xlu0 %318
        %320 = vrot.lane.b32.xlu0 %v233, 127
        %v321 = vpop.permute.xlu0 %320
        %322 = vrot.lane.b32.xlu0 %v234, 127
        %v323 = vpop.permute.xlu0 %322
        %vm324 = vcmp.lt.s32.totalorder %v236, 127
        %v325 = vsel %vm324, %v321, %v323
        %v326 = vsel %vm324, %v319, %v321
        %v327 = vsel %vm324, %v317, %v319
        %v328 = vsel %vm324, %v323, %v317
        %v329 = vsel %vm292, %v327, 0.0
        %v330 = vsel %vm293, %v326, 0.0
        %v331 = vsel %vm294, %v325, 0.0
        %v332 = vsel %vm295, %v328, 0.0
        %334 = vset.pattern.permute.xlu0 0
        %335 = vperm.xlu0 %334, %v298
        %v336 = vpop.permute.xlu0 %335
        %vm338 = vcmask 195584
        %v340 = vsel %vm338, %v296, 0
        %342 = vmatprep.subr.mxu0 0.0
        %343 = vmatpush1.msra.mxu0 0.0
        %344 = vmatprep.subr.mxu0 0.0
        %345 = vmatpush1.msra.mxu0 0.0
        %346 = vmatprep.subr.mxu0 0.0
        %347 = vmatpush1.msra.mxu0 0.0
        %348 = vmatprep.subr.mxu0 0.0
        %349 = vmatpush1.msra.mxu0 0.0
        %350 = vmatprep.subr.mxu0 0.0
        %351 = vmatpush1.msra.mxu0 0.0
        %352 = vmatprep.subr.mxu0 0.0
        %353 = vmatpush1.msra.mxu0 0.0
        %354 = vmatprep.subr.mxu0 0.0
        %355 = vmatpush1.msra.mxu0 0.0
        %356 = vmatprep.subr.mxu0 0.0
        %357 = vmatpush1.msra.mxu0 0.0
        %358 = vmatprep.subr.mxu0 0.0
        %359 = vmatpush1.msra.mxu0 0.0
        %360 = vmatprep.subr.mxu0 0.0
        %361 = vmatpush1.msra.mxu0 0.0
        %362 = vmatprep.subr.mxu0 0.0
        %363 = vmatpush1.msra.mxu0 0.0
        %364 = vmatprep.subr.mxu0 0.0
        %365 = vmatpush1.msra.mxu0 0.0
        %366 = vmatprep.subr.mxu0 0.0
        %367 = vmatpush1.msra.mxu0 0.0
        %368 = vmatprep.subr.mxu0 %v330
        %369 = vmatpush1.msra.mxu0 %v329
        %370 = vmatprep.subr.mxu0 %v232
        %371 = vmatpush1.msra.mxu0 %v231
        %372 = vmatprep.subr.mxu0 %v313
        %373 = vmatpush1.msra.mxu0 %v312
        %374 = vmatprep.subr.mxu0 0.0
        %375 = vmatpush2.msra.mxu0 0.0
        %376 = vmatprep.subr.mxu0 0.0
        %377 = vmatpush2.msra.mxu0 0.0
        %378 = vmatprep.subr.mxu0 0.0
        %379 = vmatpush2.msra.mxu0 0.0
        %380 = vmatprep.subr.mxu0 0.0
        %381 = vmatpush2.msra.mxu0 0.0
        %382 = vmatprep.subr.mxu0 0.0
        %383 = vmatpush2.msra.mxu0 0.0
        %384 = vmatprep.subr.mxu0 0.0
        %385 = vmatpush2.msra.mxu0 0.0
        %386 = vmatprep.subr.mxu0 0.0
        %387 = vmatpush2.msra.mxu0 0.0
        %388 = vmatprep.subr.mxu0 0.0
        %389 = vmatpush2.msra.mxu0 0.0
        %390 = vmatprep.subr.mxu0 0.0
        %391 = vmatpush2.msra.mxu0 0.0
        %392 = vmatprep.subr.mxu0 0.0
        %393 = vmatpush2.msra.mxu0 0.0
        %394 = vmatprep.subr.mxu0 0.0
        %395 = vmatpush2.msra.mxu0 0.0
        %396 = vmatprep.subr.mxu0 0.0
        %397 = vmatpush2.msra.mxu0 0.0
        %398 = vmatprep.subr.mxu0 0.0
        %399 = vmatpush2.msra.mxu0 0.0
        %400 = vmatprep.subr.mxu0 0.0
        %401 = vmatpush2.msra.mxu0 0.0
        %402 = vmatprep.subr.mxu0 0.0
        %403 = vmatpush2.msra.mxu0 0.0
        %404 = vmatprep.subr.mxu0 0.0
        %405 = vmatpush2.msra.mxu0 0.0
        %406 = vmatprep.mubr.f32.mxu0 0.0
        %407 = vmatmul.mubr.f32.gmra.mxu0 %v340
        %v408 = vpop.f32.mrf.mxu0
        %v409 = vadd.f32 %v336, %v408
        %v410 = vpop.f32.mrf.mxu0
        %v411 = vadd.f32 %v336, %v410
        %412 = vdwg.mxu0
        %413 = vmatprep.subr.mxu0 0.0
        %414 = vmatpush1.msra.mxu0 0.0
        %415 = vmatprep.subr.mxu0 0.0
        %416 = vmatpush1.msra.mxu0 0.0
        %417 = vmatprep.subr.mxu0 0.0
        %418 = vmatpush1.msra.mxu0 0.0
        %419 = vmatprep.subr.mxu0 0.0
        %420 = vmatpush1.msra.mxu0 0.0
        %421 = vmatprep.subr.mxu0 0.0
        %422 = vmatpush1.msra.mxu0 0.0
        %423 = vmatprep.subr.mxu0 0.0
        %424 = vmatpush1.msra.mxu0 0.0
        %425 = vmatprep.subr.mxu0 0.0
        %426 = vmatpush1.msra.mxu0 0.0
        %427 = vmatprep.subr.mxu0 0.0
        %428 = vmatpush1.msra.mxu0 0.0
        %429 = vmatprep.subr.mxu0 0.0
        %430 = vmatpush1.msra.mxu0 0.0
        %431 = vmatprep.subr.mxu0 0.0
        %432 = vmatpush1.msra.mxu0 0.0
        %433 = vmatprep.subr.mxu0 0.0
        %434 = vmatpush1.msra.mxu0 0.0
        %435 = vmatprep.subr.mxu0 0.0
        %436 = vmatpush1.msra.mxu0 0.0
        %437 = vmatprep.subr.mxu0 0.0
        %438 = vmatpush1.msra.mxu0 0.0
        %439 = vmatprep.subr.mxu0 %v332
        %440 = vmatpush1.msra.mxu0 %v331
        %441 = vmatprep.subr.mxu0 %v234
        %442 = vmatpush1.msra.mxu0 %v233
        %443 = vmatprep.subr.mxu0 %v315
        %444 = vmatpush1.msra.mxu0 %v314
        %445 = vmatprep.subr.mxu0 0.0
        %446 = vmatpush2.msra.mxu0 0.0
        %447 = vmatprep.subr.mxu0 0.0
        %448 = vmatpush2.msra.mxu0 0.0
        %449 = vmatprep.subr.mxu0 0.0
        %450 = vmatpush2.msra.mxu0 0.0
        %451 = vmatprep.subr.mxu0 0.0
        %452 = vmatpush2.msra.mxu0 0.0
        %453 = vmatprep.subr.mxu0 0.0
        %454 = vmatpush2.msra.mxu0 0.0
        %455 = vmatprep.subr.mxu0 0.0
        %456 = vmatpush2.msra.mxu0 0.0
        %457 = vmatprep.subr.mxu0 0.0
        %458 = vmatpush2.msra.mxu0 0.0
        %459 = vmatprep.subr.mxu0 0.0
        %460 = vmatpush2.msra.mxu0 0.0
        %461 = vmatprep.subr.mxu0 0.0
        %462 = vmatpush2.msra.mxu0 0.0
        %463 = vmatprep.subr.mxu0 0.0
        %464 = vmatpush2.msra.mxu0 0.0
        %465 = vmatprep.subr.mxu0 0.0
        %466 = vmatpush2.msra.mxu0 0.0
        %467 = vmatprep.subr.mxu0 0.0
        %468 = vmatpush2.msra.mxu0 0.0
        %469 = vmatprep.subr.mxu0 0.0
        %470 = vmatpush2.msra.mxu0 0.0
        %471 = vmatprep.subr.mxu0 0.0
        %472 = vmatpush2.msra.mxu0 0.0
        %473 = vmatprep.subr.mxu0 0.0
        %474 = vmatpush2.msra.mxu0 0.0
        %475 = vmatprep.subr.mxu0 0.0
        %476 = vmatpush2.msra.mxu0 0.0
        %477 = vmatprep.mubr.f32.mxu0 0.0
        %478 = vmatmul.mubr.f32.gmra.mxu0 %v340
        %v479 = vpop.f32.mrf.mxu0
        %v480 = vadd.f32 %v336, %v479
        %v481 = vpop.f32.mrf.mxu0
        %v482 = vadd.f32 %v336, %v481
        %483 = vdwg.mxu0
        %v484 = vmax.f32 %v409, 0.0
        %v485 = vmax.f32 %v411, 0.0
        %v486 = vmax.f32 %v480, 0.0
        %v487 = vmax.f32 %v482, 0.0
        %488 = vrot.lane.b32.xlu0 %v484, 1
        %v489 = vpop.permute.xlu0 %488
        %490 = vrot.lane.b32.xlu0 %v485, 1
        %v491 = vpop.permute.xlu0 %490
        %492 = vrot.lane.b32.xlu0 %v486, 1
        %v493 = vpop.permute.xlu0 %492
        %494 = vrot.lane.b32.xlu0 %v487, 1
        %v495 = vpop.permute.xlu0 %494
        %v496 = vsel %vm307, %v493, %v495
        %v497 = vsel %vm307, %v491, %v493
        %v498 = vsel %vm307, %v489, %v491
        %v499 = vsel %vm307, %v495, %v489
        %v500 = vsel %vm288, %v499, 0.0
        %v501 = vsel %vm289, %v498, 0.0
        %v502 = vsel %vm290, %v497, 0.0
        %v503 = vsel %vm291, %v496, 0.0
        %504 = vrot.lane.b32.xlu0 %v484, 127
        %v505 = vpop.permute.xlu0 %504
        %506 = vrot.lane.b32.xlu0 %v485, 127
        %v507 = vpop.permute.xlu0 %506
        %508 = vrot.lane.b32.xlu0 %v486, 127
        %v509 = vpop.permute.xlu0 %508
        %510 = vrot.lane.b32.xlu0 %v487, 127
        %v511 = vpop.permute.xlu0 %510
        %v512 = vsel %vm324, %v509, %v511
        %v513 = vsel %vm324, %v507, %v509
        %v514 = vsel %vm324, %v505, %v507
        %v515 = vsel %vm324, %v511, %v505
        %v516 = vsel %vm292, %v514, 0.0
        %v517 = vsel %vm293, %v513, 0.0
        %v518 = vsel %vm294, %v512, 0.0
        %v519 = vsel %vm295, %v515, 0.0
        %520 = vset.pattern.permute.xlu0 1
        %521 = vperm.xlu0 %520, %v298
        %v522 = vpop.permute.xlu0 %521
        %vm524 = vcmask 261120
        %v526 = vsel %vm524, %v297, 0
        %528 = vmatprep.subr.mxu0 0.0
        %529 = vmatpush1.msra.mxu0 0.0
        %530 = vmatprep.subr.mxu0 0.0
        %531 = vmatpush1.msra.mxu0 0.0
        %532 = vmatprep.subr.mxu0 0.0
        %533 = vmatpush1.msra.mxu0 0.0
        %534 = vmatprep.subr.mxu0 0.0
        %535 = vmatpush1.msra.mxu0 0.0
        %536 = vmatprep.subr.mxu0 0.0
        %537 = vmatpush1.msra.mxu0 0.0
        %538 = vmatprep.subr.mxu0 0.0
        %539 = vmatpush1.msra.mxu0 0.0
        %540 = vmatprep.subr.mxu0 0.0
        %541 = vmatpush1.msra.mxu0 0.0
        %542 = vmatprep.subr.mxu0 0.0
        %543 = vmatpush1.msra.mxu0 0.0
        %544 = vmatprep.subr.mxu0 0.0
        %545 = vmatpush1.msra.mxu0 0.0
        %546 = vmatprep.subr.mxu0 0.0
        %547 = vmatpush1.msra.mxu0 0.0
        %548 = vmatprep.subr.mxu0 0.0
        %549 = vmatpush1.msra.mxu0 0.0
        %550 = vmatprep.subr.mxu0 0.0
        %551 = vmatpush1.msra.mxu0 0.0
        %552 = vmatprep.subr.mxu0 %v232
        %553 = vmatpush1.msra.mxu0 %v231
        %554 = vmatprep.subr.mxu0 %v517
        %555 = vmatpush1.msra.mxu0 %v516
        %556 = vmatprep.subr.mxu0 %v485
        %557 = vmatpush1.msra.mxu0 %v484
        %558 = vmatprep.subr.mxu0 %v501
        %559 = vmatpush1.msra.mxu0 %v500
        %560 = vmatprep.subr.mxu0 0.0
        %561 = vmatpush2.msra.mxu0 0.0
        %562 = vmatprep.subr.mxu0 0.0
        %563 = vmatpush2.msra.mxu0 0.0
        %564 = vmatprep.subr.mxu0 0.0
        %565 = vmatpush2.msra.mxu0 0.0
        %566 = vmatprep.subr.mxu0 0.0
        %567 = vmatpush2.msra.mxu0 0.0
        %568 = vmatprep.subr.mxu0 0.0
        %569 = vmatpush2.msra.mxu0 0.0
        %570 = vmatprep.subr.mxu0 0.0
        %571 = vmatpush2.msra.mxu0 0.0
        %572 = vmatprep.subr.mxu0 0.0
        %573 = vmatpush2.msra.mxu0 0.0
        %574 = vmatprep.subr.mxu0 0.0
        %575 = vmatpush2.msra.mxu0 0.0
        %576 = vmatprep.subr.mxu0 0.0
        %577 = vmatpush2.msra.mxu0 0.0
        %578 = vmatprep.subr.mxu0 0.0
        %579 = vmatpush2.msra.mxu0 0.0
        %580 = vmatprep.subr.mxu0 0.0
        %581 = vmatpush2.msra.mxu0 0.0
        %582 = vmatprep.subr.mxu0 0.0
        %583 = vmatpush2.msra.mxu0 0.0
        %584 = vmatprep.subr.mxu0 0.0
        %585 = vmatpush2.msra.mxu0 0.0
        %586 = vmatprep.subr.mxu0 0.0
        %587 = vmatpush2.msra.mxu0 0.0
        %588 = vmatprep.subr.mxu0 0.0
        %589 = vmatpush2.msra.mxu0 0.0
        %590 = vmatprep.subr.mxu0 0.0
        %591 = vmatpush2.msra.mxu0 0.0
        %592 = vmatprep.mubr.f32.mxu0 0.0
        %593 = vmatmul.mubr.f32.gmra.mxu0 %v526
        %v594 = vpop.f32.mrf.mxu0
        %v595 = vadd.f32 %v522, %v594
        %v596 = vpop.f32.mrf.mxu0
        %v597 = vadd.f32 %v522, %v596
        %598 = vdwg.mxu0
        %599 = vmatprep.subr.mxu0 0.0
        %600 = vmatpush1.msra.mxu0 0.0
        %601 = vmatprep.subr.mxu0 0.0
        %602 = vmatpush1.msra.mxu0 0.0
        %603 = vmatprep.subr.mxu0 0.0
        %604 = vmatpush1.msra.mxu0 0.0
        %605 = vmatprep.subr.mxu0 0.0
        %606 = vmatpush1.msra.mxu0 0.0
        %607 = vmatprep.subr.mxu0 0.0
        %608 = vmatpush1.msra.mxu0 0.0
        %609 = vmatprep.subr.mxu0 0.0
        %610 = vmatpush1.msra.mxu0 0.0
        %611 = vmatprep.subr.mxu0 0.0
        %612 = vmatpush1.msra.mxu0 0.0
        %613 = vmatprep.subr.mxu0 0.0
        %614 = vmatpush1.msra.mxu0 0.0
        %615 = vmatprep.subr.mxu0 0.0
        %616 = vmatpush1.msra.mxu0 0.0
        %617 = vmatprep.subr.mxu0 0.0
        %618 = vmatpush1.msra.mxu0 0.0
        %619 = vmatprep.subr.mxu0 0.0
        %620 = vmatpush1.msra.mxu0 0.0
        %621 = vmatprep.subr.mxu0 0.0
        %622 = vmatpush1.msra.mxu0 0.0
        %623 = vmatprep.subr.mxu0 %v234
        %624 = vmatpush1.msra.mxu0 %v233
        %625 = vmatprep.subr.mxu0 %v519
        %626 = vmatpush1.msra.mxu0 %v518
        %627 = vmatprep.subr.mxu0 %v487
        %628 = vmatpush1.msra.mxu0 %v486
        %629 = vmatprep.subr.mxu0 %v503
        %630 = vmatpush1.msra.mxu0 %v502
        %631 = vmatprep.subr.mxu0 0.0
        %632 = vmatpush2.msra.mxu0 0.0
        %633 = vmatprep.subr.mxu0 0.0
        %634 = vmatpush2.msra.mxu0 0.0
        %635 = vmatprep.subr.mxu0 0.0
        %636 = vmatpush2.msra.mxu0 0.0
        %637 = vmatprep.subr.mxu0 0.0
        %638 = vmatpush2.msra.mxu0 0.0
        %639 = vmatprep.subr.mxu0 0.0
        %640 = vmatpush2.msra.mxu0 0.0
        %641 = vmatprep.subr.mxu0 0.0
        %642 = vmatpush2.msra.mxu0 0.0
        %643 = vmatprep.subr.mxu0 0.0
        %644 = vmatpush2.msra.mxu0 0.0
        %645 = vmatprep.subr.mxu0 0.0
        %646 = vmatpush2.msra.mxu0 0.0
        %647 = vmatprep.subr.mxu0 0.0
        %648 = vmatpush2.msra.mxu0 0.0
        %649 = vmatprep.subr.mxu0 0.0
        %650 = vmatpush2.msra.mxu0 0.0
        %651 = vmatprep.subr.mxu0 0.0
        %652 = vmatpush2.msra.mxu0 0.0
        %653 = vmatprep.subr.mxu0 0.0
        %654 = vmatpush2.msra.mxu0 0.0
        %655 = vmatprep.subr.mxu0 0.0
        %656 = vmatpush2.msra.mxu0 0.0
        %657 = vmatprep.subr.mxu0 0.0
        %658 = vmatpush2.msra.mxu0 0.0
        %659 = vmatprep.subr.mxu0 0.0
        %660 = vmatpush2.msra.mxu0 0.0
        %661 = vmatprep.subr.mxu0 0.0
        %662 = vmatpush2.msra.mxu0 0.0
        %663 = vmatprep.mubr.f32.mxu0 0.0
        %664 = vmatmul.mubr.f32.gmra.mxu0 %v526
        %v665 = vpop.f32.mrf.mxu0
        %v666 = vadd.f32 %v522, %v665
        %v667 = vpop.f32.mrf.mxu0
        %v668 = vadd.f32 %v522, %v667
        %669 = vdwg.mxu0
        %s670 = scalar_lea.vmem %s1, 8
        %v671 = vld [vmem:[%s670] sm:$0xff]
        %s672 = scalar_lea.vmem [#allocation5], 8
        %v673 = vld [vmem:[%s672] sm:$0xff]
        %s674 = scalar_lea.vmem %s3, 8
        %v675 = vld [vmem:[%s674] sm:$0xff]
        %676 = vrot.lane.b32.xlu0 %v595, 1
        %v677 = vpop.permute.xlu0 %676
        %678 = vrot.lane.b32.xlu0 %v597, 1
        %v679 = vpop.permute.xlu0 %678
        %680 = vrot.lane.b32.xlu0 %v666, 1
        %v681 = vpop.permute.xlu0 %680
        %682 = vrot.lane.b32.xlu0 %v668, 1
        %v683 = vpop.permute.xlu0 %682
        %v684 = vsel %vm307, %v681, %v683
        %v685 = vsel %vm307, %v679, %v681
        %v686 = vsel %vm307, %v677, %v679
        %v687 = vsel %vm307, %v683, %v677
        %v688 = vsel %vm288, %v687, 0.0
        %v689 = vsel %vm289, %v686, 0.0
        %v690 = vsel %vm290, %v685, 0.0
        %v691 = vsel %vm291, %v684, 0.0
        %692 = vrot.lane.b32.xlu0 %v595, 127
        %v693 = vpop.permute.xlu0 %692
        %694 = vrot.lane.b32.xlu0 %v597, 127
        %v695 = vpop.permute.xlu0 %694
        %696 = vrot.lane.b32.xlu0 %v666, 127
        %v697 = vpop.permute.xlu0 %696
        %698 = vrot.lane.b32.xlu0 %v668, 127
        %v699 = vpop.permute.xlu0 %698
        %v700 = vsel %vm324, %v697, %v699
        %v701 = vsel %vm324, %v695, %v697
        %v702 = vsel %vm324, %v693, %v695
        %v703 = vsel %vm324, %v699, %v693
        %v704 = vsel %vm292, %v702, 0.0
        %v705 = vsel %vm293, %v701, 0.0
        %v706 = vsel %vm294, %v700, 0.0
        %v707 = vsel %vm295, %v703, 0.0
        %709 = vset.pattern.permute.xlu0 0
        %710 = vperm.xlu0 %709, %v675
        %v711 = vpop.permute.xlu0 %710
        %v714 = vsel %vm338, %v671, 0
        %716 = vmatprep.subr.mxu0 0.0
        %717 = vmatpush1.msra.mxu0 0.0
        %718 = vmatprep.subr.mxu0 0.0
        %719 = vmatpush1.msra.mxu0 0.0
        %720 = vmatprep.subr.mxu0 0.0
        %721 = vmatpush1.msra.mxu0 0.0
        %722 = vmatprep.subr.mxu0 0.0
        %723 = vmatpush1.msra.mxu0 0.0
        %724 = vmatprep.subr.mxu0 0.0
        %725 = vmatpush1.msra.mxu0 0.0
        %726 = vmatprep.subr.mxu0 0.0
        %727 = vmatpush1.msra.mxu0 0.0
        %728 = vmatprep.subr.mxu0 0.0
        %729 = vmatpush1.msra.mxu0 0.0
        %730 = vmatprep.subr.mxu0 0.0
        %731 = vmatpush1.msra.mxu0 0.0
        %732 = vmatprep.subr.mxu0 0.0
        %733 = vmatpush1.msra.mxu0 0.0
        %734 = vmatprep.subr.mxu0 0.0
        %735 = vmatpush1.msra.mxu0 0.0
        %736 = vmatprep.subr.mxu0 0.0
        %737 = vmatpush1.msra.mxu0 0.0
        %738 = vmatprep.subr.mxu0 0.0
        %739 = vmatpush1.msra.mxu0 0.0
        %740 = vmatprep.subr.mxu0 0.0
        %741 = vmatpush1.msra.mxu0 0.0
        %742 = vmatprep.subr.mxu0 %v705
        %743 = vmatpush1.msra.mxu0 %v704
        %744 = vmatprep.subr.mxu0 %v597
        %745 = vmatpush1.msra.mxu0 %v595
        %746 = vmatprep.subr.mxu0 %v689
        %747 = vmatpush1.msra.mxu0 %v688
        %748 = vmatprep.subr.mxu0 0.0
        %749 = vmatpush2.msra.mxu0 0.0
        %750 = vmatprep.subr.mxu0 0.0
        %751 = vmatpush2.msra.mxu0 0.0
        %752 = vmatprep.subr.mxu0 0.0
        %753 = vmatpush2.msra.mxu0 0.0
        %754 = vmatprep.subr.mxu0 0.0
        %755 = vmatpush2.msra.mxu0 0.0
        %756 = vmatprep.subr.mxu0 0.0
        %757 = vmatpush2.msra.mxu0 0.0
        %758 = vmatprep.subr.mxu0 0.0
        %759 = vmatpush2.msra.mxu0 0.0
        %760 = vmatprep.subr.mxu0 0.0
        %761 = vmatpush2.msra.mxu0 0.0
        %762 = vmatprep.subr.mxu0 0.0
        %763 = vmatpush2.msra.mxu0 0.0
        %764 = vmatprep.subr.mxu0 0.0
        %765 = vmatpush2.msra.mxu0 0.0
        %766 = vmatprep.subr.mxu0 0.0
        %767 = vmatpush2.msra.mxu0 0.0
        %768 = vmatprep.subr.mxu0 0.0
        %769 = vmatpush2.msra.mxu0 0.0
        %770 = vmatprep.subr.mxu0 0.0
        %771 = vmatpush2.msra.mxu0 0.0
        %772 = vmatprep.subr.mxu0 0.0
        %773 = vmatpush2.msra.mxu0 0.0
        %774 = vmatprep.subr.mxu0 0.0
        %775 = vmatpush2.msra.mxu0 0.0
        %776 = vmatprep.subr.mxu0 0.0
        %777 = vmatpush2.msra.mxu0 0.0
        %778 = vmatprep.subr.mxu0 0.0
        %779 = vmatpush2.msra.mxu0 0.0
        %780 = vmatprep.mubr.f32.mxu0 0.0
        %781 = vmatmul.mubr.f32.gmra.mxu0 %v714
        %v782 = vpop.f32.mrf.mxu0
        %v783 = vadd.f32 %v711, %v782
        %v784 = vpop.f32.mrf.mxu0
        %v785 = vadd.f32 %v711, %v784
        %786 = vdwg.mxu0
        %787 = vmatprep.subr.mxu0 0.0
        %788 = vmatpush1.msra.mxu0 0.0
        %789 = vmatprep.subr.mxu0 0.0
        %790 = vmatpush1.msra.mxu0 0.0
        %791 = vmatprep.subr.mxu0 0.0
        %792 = vmatpush1.msra.mxu0 0.0
        %793 = vmatprep.subr.mxu0 0.0
        %794 = vmatpush1.msra.mxu0 0.0
        %795 = vmatprep.subr.mxu0 0.0
        %796 = vmatpush1.msra.mxu0 0.0
        %797 = vmatprep.subr.mxu0 0.0
        %798 = vmatpush1.msra.mxu0 0.0
        %799 = vmatprep.subr.mxu0 0.0
        %800 = vmatpush1.msra.mxu0 0.0
        %801 = vmatprep.subr.mxu0 0.0
        %802 = vmatpush1.msra.mxu0 0.0
        %803 = vmatprep.subr.mxu0 0.0
        %804 = vmatpush1.msra.mxu0 0.0
        %805 = vmatprep.subr.mxu0 0.0
        %806 = vmatpush1.msra.mxu0 0.0
        %807 = vmatprep.subr.mxu0 0.0
        %808 = vmatpush1.msra.mxu0 0.0
        %809 = vmatprep.subr.mxu0 0.0
        %810 = vmatpush1.msra.mxu0 0.0
        %811 = vmatprep.subr.mxu0 0.0
        %812 = vmatpush1.msra.mxu0 0.0
        %813 = vmatprep.subr.mxu0 %v707
        %814 = vmatpush1.msra.mxu0 %v706
        %815 = vmatprep.subr.mxu0 %v668
        %816 = vmatpush1.msra.mxu0 %v666
        %817 = vmatprep.subr.mxu0 %v691
        %818 = vmatpush1.msra.mxu0 %v690
        %819 = vmatprep.subr.mxu0 0.0
        %820 = vmatpush2.msra.mxu0 0.0
        %821 = vmatprep.subr.mxu0 0.0
        %822 = vmatpush2.msra.mxu0 0.0
        %823 = vmatprep.subr.mxu0 0.0
        %824 = vmatpush2.msra.mxu0 0.0
        %825 = vmatprep.subr.mxu0 0.0
        %826 = vmatpush2.msra.mxu0 0.0
        %827 = vmatprep.subr.mxu0 0.0
        %828 = vmatpush2.msra.mxu0 0.0
        %829 = vmatprep.subr.mxu0 0.0
        %830 = vmatpush2.msra.mxu0 0.0
        %831 = vmatprep.subr.mxu0 0.0
        %832 = vmatpush2.msra.mxu0 0.0
        %833 = vmatprep.subr.mxu0 0.0
        %834 = vmatpush2.msra.mxu0 0.0
        %835 = vmatprep.subr.mxu0 0.0
        %836 = vmatpush2.msra.mxu0 0.0
        %837 = vmatprep.subr.mxu0 0.0
        %838 = vmatpush2.msra.mxu0 0.0
        %839 = vmatprep.subr.mxu0 0.0
        %840 = vmatpush2.msra.mxu0 0.0
        %841 = vmatprep.subr.mxu0 0.0
        %842 = vmatpush2.msra.mxu0 0.0
        %843 = vmatprep.subr.mxu0 0.0
        %844 = vmatpush2.msra.mxu0 0.0
        %845 = vmatprep.subr.mxu0 0.0
        %846 = vmatpush2.msra.mxu0 0.0
        %847 = vmatprep.subr.mxu0 0.0
        %848 = vmatpush2.msra.mxu0 0.0
        %849 = vmatprep.subr.mxu0 0.0
        %850 = vmatpush2.msra.mxu0 0.0
        %851 = vmatprep.mubr.f32.mxu0 0.0
        %852 = vmatmul.mubr.f32.gmra.mxu0 %v714
        %v853 = vpop.f32.mrf.mxu0
        %v854 = vadd.f32 %v711, %v853
        %v855 = vpop.f32.mrf.mxu0
        %v856 = vadd.f32 %v711, %v855
        %857 = vdwg.mxu0
        %v858 = vmax.f32 %v783, 0.0
        %v859 = vmax.f32 %v785, 0.0
        %v860 = vmax.f32 %v854, 0.0
        %v861 = vmax.f32 %v856, 0.0
        %862 = vrot.lane.b32.xlu0 %v858, 1
        %v863 = vpop.permute.xlu0 %862
        %864 = vrot.lane.b32.xlu0 %v859, 1
        %v865 = vpop.permute.xlu0 %864
        %866 = vrot.lane.b32.xlu0 %v860, 1
        %v867 = vpop.permute.xlu0 %866
        %868 = vrot.lane.b32.xlu0 %v861, 1
        %v869 = vpop.permute.xlu0 %868
        %v870 = vsel %vm307, %v867, %v869
        %v871 = vsel %vm307, %v865, %v867
        %v872 = vsel %vm307, %v863, %v865
        %v873 = vsel %vm307, %v869, %v863
        %v874 = vsel %vm288, %v873, 0.0
        %v875 = vsel %vm289, %v872, 0.0
        %v876 = vsel %vm290, %v871, 0.0
        %v877 = vsel %vm291, %v870, 0.0
        %878 = vrot.lane.b32.xlu0 %v858, 127
        %v879 = vpop.permute.xlu0 %878
        %880 = vrot.lane.b32.xlu0 %v859, 127
        %v881 = vpop.permute.xlu0 %880
        %882 = vrot.lane.b32.xlu0 %v860, 127
        %v883 = vpop.permute.xlu0 %882
        %884 = vrot.lane.b32.xlu0 %v861, 127
        %v885 = vpop.permute.xlu0 %884
        %v886 = vsel %vm324, %v883, %v885
        %v887 = vsel %vm324, %v881, %v883
        %v888 = vsel %vm324, %v879, %v881
        %v889 = vsel %vm324, %v885, %v879
        %v890 = vsel %vm292, %v888, 0.0
        %v891 = vsel %vm293, %v887, 0.0
        %v892 = vsel %vm294, %v886, 0.0
        %v893 = vsel %vm295, %v889, 0.0
        %894 = vset.pattern.permute.xlu0 1
        %895 = vperm.xlu0 %894, %v675
        %v896 = vpop.permute.xlu0 %895
        %v899 = vsel %vm524, %v673, 0
        %901 = vmatprep.subr.mxu0 0.0
        %902 = vmatpush1.msra.mxu0 0.0
        %903 = vmatprep.subr.mxu0 0.0
        %904 = vmatpush1.msra.mxu0 0.0
        %905 = vmatprep.subr.mxu0 0.0
        %906 = vmatpush1.msra.mxu0 0.0
        %907 = vmatprep.subr.mxu0 0.0
        %908 = vmatpush1.msra.mxu0 0.0
        %909 = vmatprep.subr.mxu0 0.0
        %910 = vmatpush1.msra.mxu0 0.0
        %911 = vmatprep.subr.mxu0 0.0
        %912 = vmatpush1.msra.mxu0 0.0
        %913 = vmatprep.subr.mxu0 0.0
        %914 = vmatpush1.msra.mxu0 0.0
        %915 = vmatprep.subr.mxu0 0.0
        %916 = vmatpush1.msra.mxu0 0.0
        %917 = vmatprep.subr.mxu0 0.0
        %918 = vmatpush1.msra.mxu0 0.0
        %919 = vmatprep.subr.mxu0 0.0
        %920 = vmatpush1.msra.mxu0 0.0
        %921 = vmatprep.subr.mxu0 0.0
        %922 = vmatpush1.msra.mxu0 0.0
        %923 = vmatprep.subr.mxu0 0.0
        %924 = vmatpush1.msra.mxu0 0.0
        %925 = vmatprep.subr.mxu0 %v597
        %926 = vmatpush1.msra.mxu0 %v595
        %927 = vmatprep.subr.mxu0 %v891
        %928 = vmatpush1.msra.mxu0 %v890
        %929 = vmatprep.subr.mxu0 %v859
        %930 = vmatpush1.msra.mxu0 %v858
        %931 = vmatprep.subr.mxu0 %v875
        %932 = vmatpush1.msra.mxu0 %v874
        %933 = vmatprep.subr.mxu0 0.0
        %934 = vmatpush2.msra.mxu0 0.0
        %935 = vmatprep.subr.mxu0 0.0
        %936 = vmatpush2.msra.mxu0 0.0
        %937 = vmatprep.subr.mxu0 0.0
        %938 = vmatpush2.msra.mxu0 0.0
        %939 = vmatprep.subr.mxu0 0.0
        %940 = vmatpush2.msra.mxu0 0.0
        %941 = vmatprep.subr.mxu0 0.0
        %942 = vmatpush2.msra.mxu0 0.0
        %943 = vmatprep.subr.mxu0 0.0
        %944 = vmatpush2.msra.mxu0 0.0
        %945 = vmatprep.subr.mxu0 0.0
        %946 = vmatpush2.msra.mxu0 0.0
        %947 = vmatprep.subr.mxu0 0.0
        %948 = vmatpush2.msra.mxu0 0.0
        %949 = vmatprep.subr.mxu0 0.0
        %950 = vmatpush2.msra.mxu0 0.0
        %951 = vmatprep.subr.mxu0 0.0
        %952 = vmatpush2.msra.mxu0 0.0
        %953 = vmatprep.subr.mxu0 0.0
        %954 = vmatpush2.msra.mxu0 0.0
        %955 = vmatprep.subr.mxu0 0.0
        %956 = vmatpush2.msra.mxu0 0.0
        %957 = vmatprep.subr.mxu0 0.0
        %958 = vmatpush2.msra.mxu0 0.0
        %959 = vmatprep.subr.mxu0 0.0
        %960 = vmatpush2.msra.mxu0 0.0
        %961 = vmatprep.subr.mxu0 0.0
        %962 = vmatpush2.msra.mxu0 0.0
        %963 = vmatprep.subr.mxu0 0.0
        %964 = vmatpush2.msra.mxu0 0.0
        %965 = vmatprep.mubr.f32.mxu0 0.0
        %966 = vmatmul.mubr.f32.gmra.mxu0 %v899
        %v967 = vpop.f32.mrf.mxu0
        %v968 = vadd.f32 %v896, %v967
        %v969 = vpop.f32.mrf.mxu0
        %v970 = vadd.f32 %v896, %v969
        %971 = vdwg.mxu0
        %972 = vmatprep.subr.mxu0 0.0
        %973 = vmatpush1.msra.mxu0 0.0
        %974 = vmatprep.subr.mxu0 0.0
        %975 = vmatpush1.msra.mxu0 0.0
        %976 = vmatprep.subr.mxu0 0.0
        %977 = vmatpush1.msra.mxu0 0.0
        %978 = vmatprep.subr.mxu0 0.0
        %979 = vmatpush1.msra.mxu0 0.0
        %980 = vmatprep.subr.mxu0 0.0
        %981 = vmatpush1.msra.mxu0 0.0
        %982 = vmatprep.subr.mxu0 0.0
        %983 = vmatpush1.msra.mxu0 0.0
        %984 = vmatprep.subr.mxu0 0.0
        %985 = vmatpush1.msra.mxu0 0.0
        %986 = vmatprep.subr.mxu0 0.0
        %987 = vmatpush1.msra.mxu0 0.0
        %988 = vmatprep.subr.mxu0 0.0
        %989 = vmatpush1.msra.mxu0 0.0
        %990 = vmatprep.subr.mxu0 0.0
        %991 = vmatpush1.msra.mxu0 0.0
        %992 = vmatprep.subr.mxu0 0.0
        %993 = vmatpush1.msra.mxu0 0.0
        %994 = vmatprep.subr.mxu0 0.0
        %995 = vmatpush1.msra.mxu0 0.0
        %996 = vmatprep.subr.mxu0 %v668
        %997 = vmatpush1.msra.mxu0 %v666
        %998 = vmatprep.subr.mxu0 %v893
        %999 = vmatpush1.msra.mxu0 %v892
        %1000 = vmatprep.subr.mxu0 %v861
        %1001 = vmatpush1.msra.mxu0 %v860
        %1002 = vmatprep.subr.mxu0 %v877
        %1003 = vmatpush1.msra.mxu0 %v876
        %1004 = vmatprep.subr.mxu0 0.0
        %1005 = vmatpush2.msra.mxu0 0.0
        %1006 = vmatprep.subr.mxu0 0.0
        %1007 = vmatpush2.msra.mxu0 0.0
        %1008 = vmatprep.subr.mxu0 0.0
        %1009 = vmatpush2.msra.mxu0 0.0
        %1010 = vmatprep.subr.mxu0 0.0
        %1011 = vmatpush2.msra.mxu0 0.0
        %1012 = vmatprep.subr.mxu0 0.0
        %1013 = vmatpush2.msra.mxu0 0.0
        %1014 = vmatprep.subr.mxu0 0.0
        %1015 = vmatpush2.msra.mxu0 0.0
        %1016 = vmatprep.subr.mxu0 0.0
        %1017 = vmatpush2.msra.mxu0 0.0
        %1018 = vmatprep.subr.mxu0 0.0
        %1019 = vmatpush2.msra.mxu0 0.0
        %1020 = vmatprep.subr.mxu0 0.0
        %1021 = vmatpush2.msra.mxu0 0.0
        %1022 = vmatprep.subr.mxu0 0.0
        %1023 = vmatpush2.msra.mxu0 0.0
        %1024 = vmatprep.subr.mxu0 0.0
        %1025 = vmatpush2.msra.mxu0 0.0
        %1026 = vmatprep.subr.mxu0 0.0
        %1027 = vmatpush2.msra.mxu0 0.0
        %1028 = vmatprep.subr.mxu0 0.0
        %1029 = vmatpush2.msra.mxu0 0.0
        %1030 = vmatprep.subr.mxu0 0.0
        %1031 = vmatpush2.msra.mxu0 0.0
        %1032 = vmatprep.subr.mxu0 0.0
        %1033 = vmatpush2.msra.mxu0 0.0
        %1034 = vmatprep.subr.mxu0 0.0
        %1035 = vmatpush2.msra.mxu0 0.0
        %1036 = vmatprep.mubr.f32.mxu0 0.0
        %1037 = vmatmul.mubr.f32.gmra.mxu0 %v899
        %v1038 = vpop.f32.mrf.mxu0
        %v1039 = vadd.f32 %v896, %v1038
        %v1040 = vpop.f32.mrf.mxu0
        %v1041 = vadd.f32 %v896, %v1040
        %1042 = vdwg.mxu0
        %1043 = vst [vmem:[%s228] sm:$0xff] %v968
        %1044 = vst [vmem:[%s228 + $0x8] sm:$0xff] %v970
        %1045 = vst [vmem:[%s228 + $0x10] sm:$0xff] %v1039
        %1046 = vst [vmem:[%s228 + $0x18] sm:$0xff] %v1041
        %s1047 = sand.u32 %s119, 1
        %s1048 = scalar_lea.sflag [#allocation4], %s1047
        %s1049 = sand.u32 %s119, 1
        %s1050 = smul.addr %s1049, 32
        %s1051 = scalar_lea.vmem [#allocation7], %s1050
        // Predicated region
        $region45: #{tpu_custom_call.1} parent=35 // pred_check
          %p1052 = pneg %p129
        $region46: #{tpu_custom_call.1} parent=35 // pred_check_branch
          %1054 = sbr.rel (%p1052) target = $region48
        $region47: #{tpu_custom_call.1} parent=35 // pred_region
          %s1055 = smul.u32 4, %s22
          %s1057 = ssub.s32 512, 512
          %1058 = vsyncadd %s1048, %s1057
          %s1059 = smul.addr %s1055, 128
          %s1060 = scalar_lea.hbm %s4, %s1059
          %s1062 = sshll.u32 %s1051, 4
          %s1063 = int_to_ptr.vmem [resolvable:$true] %s1062
          %1065 = dma.vmem_to_hbm [thread:$0]  %s1063, 512, %s1060, %s1048
        $region48: #{tpu_custom_call.1} parent=35 // pred_fallthru
          _
      $region36: #{tpu_custom_call.1} parent=5 // pred_fallthru
        _
      %p1066 = scmp.le.s32.totalorder 2, %s17
      // Predicated region
      $region49: #{tpu_custom_call.1} parent=5 // pred_check
        %p1067 = pneg %p1066
      $region50: #{tpu_custom_call.1} parent=5 // pred_check_branch
        %1069 = sbr.rel (%p1067) target = $region52
      $region51: #{tpu_custom_call.1} parent=5 // pred_region
        %s1070 = ssub.s32 %s17, 2
        // Predicated region
        $region53: #{tpu_custom_call.1} parent=51 // pred_check
          %p1071 = pneg %p135
        $region54: #{tpu_custom_call.1} parent=51 // pred_check_branch
          %1073 = sbr.rel (%p1071) target = $region56
        $region55: #{tpu_custom_call.1} parent=51 // pred_region
          %s1074 = sand.u32 %s120, 1
          %s1075 = scalar_lea.sflag [#allocation4], %s1074
          %s1076 = sand.u32 %s120, 1
          %s1077 = smul.addr %s1076, 32
          %s1078 = scalar_lea.vmem [#allocation7], %s1077
          %1079 = dma.done %s1075, 512
        $region56: #{tpu_custom_call.1} parent=51 // pred_fallthru
          _
      $region52: #{tpu_custom_call.1} parent=5 // pred_fallthru
        _
    $region6: #{tpu_custom_call.1} parent=1 // loop_footer
      %s21 = sadd.s32 1, %s17
    $region7: #{tpu_custom_call.1} parent=1 // loop_footer_branch
      %16 = sbr.rel target = $region3
    $region8: #{tpu_custom_call.1} parent=1 // loop_exit
      _
    %1080 = vsyncpa [#allocation3], 1
    %s1081 = scalar_lea.sflag [#allocation3], 1
    %1082 = vsyncpa %s1081, 1
    %1083 = vsyncpa [#allocation6], 1
    %1084 = vsyncpa [#allocation4], 1
    %s1085 = scalar_lea.sflag [#allocation4], 1
    %1086 = vsyncpa %s1085, 1

</llo_original>
